<compile_context>
chip_gen: v6e
topology: v6e:2x2x1
jax: 0.10.0
libtpu: 0.0.40
codegen_flags: <defaults>
</compile_context>

<pallas_src>
import math
import functools

import jax
import jax.numpy as jnp
from jax.experimental import pallas as pl
from jax.experimental.pallas import tpu as pltpu


def _round_up(x, m):
    return ((x + m - 1) // m) * m


# ----------------------------------------------------------------------------
# Kernel 1: fused QKV projection GEMM   y = x @ W + b   (bias kept in f32)
# ----------------------------------------------------------------------------
def _proj_kernel(x_ref, w_ref, b_ref, o_ref):
    acc = jnp.dot(x_ref[...], w_ref[...], preferred_element_type=jnp.float32)
    acc = acc + b_ref[...]                       # f32 bias, no round-trip cast
    o_ref[...] = acc.astype(o_ref.dtype)


def fused_projection(x2d, w, b, *, tm_max=256, tn_max=256):
    """x2d: [M, K]; w: [K, N] (already transposed); b: [N] float32."""
    M, K = x2d.shape
    N = w.shape[1]

    # MXU-friendly tiles, clamped to the (padded) problem size.
    tm = min(tm_max, _round_up(M, 8))
    tn = min(tn_max, _round_up(N, 128))          # lane-dense output tiles
    M_pad = _round_up(M, tm)
    N_pad = _round_up(N, tn)

    if M_pad != M:
        x2d = jnp.pad(x2d, ((0, M_pad - M), (0, 0)))
    if N_pad != N:
        w = jnp.pad(w, ((0, 0), (0, N_pad - N)))
        b = jnp.pad(b, ((0, N_pad - N),))
    b2d = b.astype(jnp.float32).reshape(1, N_pad)

    # N outermost so each weight tile stays resident across the whole M sweep.
    grid = (N_pad // tn, M_pad // tm)
    cost = pl.CostEstimate(
        flops=2 * M_pad * K * N_pad,
        transcendentals=0,
        bytes_accessed=4 * (M_pad * K + K * N_pad + N_pad + M_pad * N_pad),
    )

    out = pl.pallas_call(
        _proj_kernel,
        out_shape=jax.ShapeDtypeStruct((M_pad, N_pad), x2d.dtype),
        grid_spec=pltpu.PrefetchScalarGridSpec(
            num_scalar_prefetch=0,
            grid=grid,
            in_specs=[
                pl.BlockSpec((tm, K), lambda j, i: (i, 0)),
                pl.BlockSpec((K, tn), lambda j, i: (0, j)),
                pl.BlockSpec((1, tn), lambda j, i: (0, j)),
            ],
            out_specs=pl.BlockSpec((tm, tn), lambda j, i: (i, j)),
        ),
        compiler_params=pltpu.CompilerParams(
            dimension_semantics=("parallel", "parallel")),
        cost_estimate=cost,
    )(x2d, w, b2d)
    return out[:M, :N]


# ----------------------------------------------------------------------------
# Kernel 2: flash-attention-style online-softmax attention
# ----------------------------------------------------------------------------
def _flash_attn_kernel(*refs, scale, s_valid, s_pad, tkv, has_mask):
    if has_mask:
        q_ref, k_ref, v_ref, mask_ref, o_ref, m_sc, l_sc, acc_sc = refs
    else:
        q_ref, k_ref, v_ref, o_ref, m_sc, l_sc, acc_sc = refs
        mask_ref = None

    kv_i = pl.program_id(3)

    @pl.when(kv_i == 0)
    def _init():
        m_sc[...] = jnp.full_like(m_sc, -jnp.inf)
        l_sc[...] = jnp.zeros_like(l_sc)
        acc_sc[...] = jnp.zeros_like(acc_sc)

    q = q_ref[...].astype(jnp.float32) * scale
    k = k_ref[...].astype(jnp.float32)
    v = v_ref[...].astype(jnp.float32)

    # scores (tq, tkv) = q @ k^T
    s = jax.lax.dot_general(
        q, k, dimension_numbers=(((1,), (1,)), ((), ())),
        preferred_element_type=jnp.float32)

    if has_mask:
        # Same semantics as torch: (1 - mask) * -10000 added to the scores.
        s = s + (1.0 - mask_ref[...].astype(jnp.float32)) * (-10000.0)

    if s_pad != s_valid:
        # Structural mask for the zero-padded tail of the key axis.
        kv_pos = kv_i * tkv + jax.lax.broadcasted_iota(jnp.int32, s.shape, 1)
        s = jnp.where(kv_pos < s_valid, s, -1e30)

    m_prev = m_sc[...]
    m_new = jnp.maximum(m_prev, s.max(axis=-1, keepdims=True))
    alpha = jnp.exp(m_prev - m_new)
    p = jnp.exp(s - m_new)
    l_sc[...] = alpha * l_sc[...] + p.sum(axis=-1, keepdims=True)
    acc_sc[...] = alpha * acc_sc[...] + jnp.dot(
        p, v, preferred_element_type=jnp.float32)
    m_sc[...] = m_new

    @pl.when(kv_i == pl.num_programs(3) - 1)
    def _fin():
        o_ref[...] = (acc_sc[...] / l_sc[...]).astype(o_ref.dtype)


def flash_attention(q, k, v, mask=None, *, scale, t_max=128):
    """q, k, v: [B, H, S, Dh]; mask: [B, S, S] (1 = attend, 0 = masked) or None."""
    B, Hn, S, Dh = q.shape
    t = min(t_max, _round_up(S, 8))
    S_pad = _round_up(S, t)

    if S_pad != S:
        pad = ((0, 0), (0, 0), (0, S_pad - S), (0, 0))
        q = jnp.pad(q, pad)
        k = jnp.pad(k, pad)
        v = jnp.pad(v, pad)
        if mask is not None:
            mask = jnp.pad(mask, ((0, 0), (0, S_pad - S), (0, S_pad - S)))

    has_mask = mask is not None
    kernel = functools.partial(
        _flash_attn_kernel, scale=scale, s_valid=S, s_pad=S_pad, tkv=t,
        has_mask=has_mask)

    grid = (B, Hn, S_pad // t, S_pad // t)

    in_specs = [
        pl.BlockSpec((None, None, t, Dh), lambda b, h, qi, ki: (b, h, qi, 0)),
        pl.BlockSpec((None, None, t, Dh), lambda b, h, qi, ki: (b, h, ki, 0)),
        pl.BlockSpec((None, None, t, Dh), lambda b, h, qi, ki: (b, h, ki, 0)),
    ]
    args = [q, k, v]
    if has_mask:
        in_specs.append(
            pl.BlockSpec((None, t, t), lambda b, h, qi, ki: (b, qi, ki)))
        args.append(mask.astype(jnp.float32))

    cost = pl.CostEstimate(
        flops=4 * B * Hn * S_pad * S_pad * Dh,
        transcendentals=B * Hn * S_pad * S_pad,
        bytes_accessed=4 * (4 * B * Hn * S_pad * Dh
                            + (B * S_pad * S_pad if has_mask else 0)),
    )

    out = pl.pallas_call(
        kernel,
        out_shape=jax.ShapeDtypeStruct((B, Hn, S_pad, Dh), q.dtype),
        grid_spec=pltpu.PrefetchScalarGridSpec(
            num_scalar_prefetch=0,
            grid=grid,
            in_specs=in_specs,
            out_specs=pl.BlockSpec((None, None, t, Dh),
                                   lambda b, h, qi, ki: (b, h, qi, 0)),
            scratch_shapes=[
                pltpu.VMEM((t, 1), jnp.float32),   # running max
                pltpu.VMEM((t, 1), jnp.float32),   # running denom
                pltpu.VMEM((t, Dh), jnp.float32),  # running context acc
            ],
        ),
        compiler_params=pltpu.CompilerParams(
            dimension_semantics=("parallel", "parallel", "parallel",
                                 "arbitrary")),
        cost_estimate=cost,
    )(*args)
    return out[:, :, :S, :]


# ----------------------------------------------------------------------------
# GlobalGraphRes forward (module composition)
# ----------------------------------------------------------------------------
def global_graph_res_forward(x, params, attention_mask=None):
    """x: [B, S, H]; attention_mask: [B, S, S] with 1=attend / 0=mask, or None."""
    B, S, H = x.shape
    Dh = H // 2
    (Wq0, bq0, Wk0, Wv0, bv0), (Wq1, bq1, Wk1, Wv1, bv1) = params

    # Fused QKV weights for both GlobalGraph "heads":
    # output columns = [Q0 | Q1 | K0 | K1 | V0 | V1], each Dh wide.
    W_cat = jnp.concatenate(
        [Wq0.T, Wq1.T, Wk0.T, Wk1.T, Wv0.T, Wv1.T], axis=1)        # [H, 6*Dh]
    zeros = jnp.zeros((Dh,), jnp.float32)
    b_cat = jnp.concatenate(
        [bq0.astype(jnp.float32), bq1.astype(jnp.float32),
         zeros, zeros,                                             # key: no bias
         bv0.astype(jnp.float32), bv1.astype(jnp.float32)])        # [6*Dh]

    qkv = fused_projection(x.reshape(B * S, H), W_cat, b_cat)      # [B*S, 6*Dh]
    qkv = qkv.reshape(B, S, 3, 2, Dh)
    qkv = jnp.transpose(qkv, (2, 0, 3, 1, 4))                      # [3, B, 2, S, Dh]
    q, k, v = qkv[0], qkv[1], qkv[2]

    ctx = flash_attention(q, k, v, attention_mask,
                          scale=1.0 / math.sqrt(Dh))               # [B, 2, S, Dh]
    # Heads [graph0, graph1] on the feature axis == torch.cat(..., dim=-1).
    return jnp.transpose(ctx, (0, 2, 1, 3)).reshape(B, S, H)


def init_global_graph_res_params(key, hidden_size, dtype=jnp.float32):
    """Per graph: (Wq[Dh,H], bq[Dh], Wk[Dh,H] (no bias), Wv[Dh,H], bv[Dh])."""
    Dh = hidden_size // 2
    keys = iter(jax.random.split(key, 10))
    bound = 1.0 / math.sqrt(hidden_size)

    def lin_w(k):
        return jax.random.uniform(k, (Dh, hidden_size), dtype=dtype,
                                  minval=-bound, maxval=bound)

    def lin_b(k):
        return jax.random.uniform(k, (Dh,), dtype=dtype,
                                  minval=-bound, maxval=bound)

    params = []
    for _ in range(2):
        Wq, bq = lin_w(next(keys)), lin_b(next(keys))
        Wk = lin_w(next(keys))
        Wv, bv = lin_w(next(keys)), lin_b(next(keys))
        params.append((Wq, bq, Wk, Wv, bv))
    return params


# ----------------------------------------------------------------------------
# Pure-JAX reference (mirrors the PyTorch module)
# ----------------------------------------------------------------------------
def _global_graph_ref(x, mask, Wq, bq, Wk, Wv, bv):
    Dh = Wq.shape[0]
    q = x @ Wq.T + bq
    k = x @ Wk.T
    v = x @ Wv.T + bv
    scores = jnp.einsum("bqd,bkd->bqk", q / math.sqrt(Dh), k)
    if mask is not None:
        scores = scores + (1.0 - mask) * -10000.0
    probs = jax.nn.softmax(scores, axis=-1)
    return jnp.einsum("bqk,bkd->bqd", probs, v)


def global_graph_res_ref(x, params, mask=None):
    o0 = _global_graph_ref(x, mask, *params[0])
    o1 = _global_graph_ref(x, mask, *params[1])
    return jnp.concatenate([o0, o1], axis=-1)


if __name__ == "__main__":
    key = jax.random.PRNGKey(0)
    k_x, k_p, k_m = jax.random.split(key, 3)

    batch, seq, hidden = 2, 10, 32
    x = jax.random.normal(k_x, (batch, seq, hidden), dtype=jnp.float32)
    params = init_global_graph_res_params(k_p, hidden)
    # 1 = attend, 0 = masked, exactly like the PyTorch module.
    attention_mask = (jax.random.uniform(k_m, (batch, seq, seq)) > 0.2
                      ).astype(jnp.float32)

    y = global_graph_res_forward(x, params, attention_mask)
    y = jax.block_until_ready(y)
    y_ref = global_graph_res_ref(x, params, attention_mask)
    assert y.shape == (batch, seq, hidden)
    assert jnp.allclose(y, y_ref, atol=1e-4, rtol=1e-4), \
        float(jnp.max(jnp.abs(y - y_ref)))

    # Also exercise the attention_mask=None path.
    y2 = jax.block_until_ready(global_graph_res_forward(x, params, None))
    y2_ref = global_graph_res_ref(x, params, None)
    assert jnp.allclose(y2, y2_ref, atol=1e-4, rtol=1e-4)

    print("KERNEL_OK")
</pallas_src>

<mosaic_0001>
module attributes {stable_mosaic.version = 11 : i64} {
  func.func @_proj_kernel(%arg0: i32, %arg1: i32, %arg2: memref<24x32xf32, #tpu.memory_space<vmem>>, %arg3: memref<32x128xf32, #tpu.memory_space<vmem>>, %arg4: memref<1x128xf32, #tpu.memory_space<vmem>>, %arg5: memref<24x128xf32, #tpu.memory_space<vmem>>) attributes {dimension_semantics = [#tpu.dimension_semantics<parallel>, #tpu.dimension_semantics<parallel>], iteration_bounds = array<i64: 1, 1>, scalar_prefetch = 0 : i64, scratch_operands = 0 : i64, tpu.core_type = #tpu.core_type<tc>, window_params = [{transform_indices = @transform_0, window_bounds = array<i64: 24, 32>}, {transform_indices = @transform_1, window_bounds = array<i64: 32, 128>}, {transform_indices = @transform_2, window_bounds = array<i64: 1, 128>}, {transform_indices = @transform_3, window_bounds = array<i64: 24, 128>}]} {
    %c0 = arith.constant 0 : index
    %c0_0 = arith.constant 0 : index
    %0 = vector.load %arg2[%c0, %c0_0] : memref<24x32xf32, #tpu.memory_space<vmem>>, vector<24x32xf32>
    %c0_1 = arith.constant 0 : index
    %c0_2 = arith.constant 0 : index
    %1 = vector.load %arg3[%c0_1, %c0_2] : memref<32x128xf32, #tpu.memory_space<vmem>>, vector<32x128xf32>
    %cst = arith.constant dense<0.000000e+00> : vector<24x128xf32>
    %2 = tpu.matmul %0, %1, %cst {dimension_numbers = #tpu.dot_dimension_numbers<[1], [0], [0], [1], [0, 0, 1, 1], [], []>} : vector<24x32xf32>, vector<32x128xf32>, vector<24x128xf32> -> vector<24x128xf32>
    %c0_3 = arith.constant 0 : index
    %c0_4 = arith.constant 0 : index
    %3 = vector.load %arg4[%c0_3, %c0_4] : memref<1x128xf32, #tpu.memory_space<vmem>>, vector<1x128xf32>
    %4 = vector.broadcast %3 : vector<1x128xf32> to vector<24x128xf32>
    %5 = arith.addf %2, %4 : vector<24x128xf32>
    %c0_5 = arith.constant 0 : index
    %c0_6 = arith.constant 0 : index
    %6 = vector.load %arg5[%c0_5, %c0_6] : memref<24x128xf32, #tpu.memory_space<vmem>>, vector<24x128xf32>
    tpu.vector_store %arg5[%c0_5, %c0_6], %5 {strides = array<i32>} : memref<24x128xf32, #tpu.memory_space<vmem>>, vector<24x128xf32>,
    return
  }
  func.func @transform_0(%arg0: i32, %arg1: i32) -> (i32, i32) {
    %c0_i32 = arith.constant 0 : i32
    %c0_i32_0 = arith.constant 0 : i32
    return %arg1, %c0_i32 : i32, i32
  }
  func.func @transform_1(%arg0: i32, %arg1: i32) -> (i32, i32) {
    %c0_i32 = arith.constant 0 : i32
    %c0_i32_0 = arith.constant 0 : i32
    return %c0_i32, %arg0 : i32, i32
  }
  func.func @transform_2(%arg0: i32, %arg1: i32) -> (i32, i32) {
    %c0_i32 = arith.constant 0 : i32
    %c0_i32_0 = arith.constant 0 : i32
    return %c0_i32, %arg0 : i32, i32
  }
  func.func @transform_3(%arg0: i32, %arg1: i32) -> (i32, i32) {
    %c0_i32 = arith.constant 0 : i32
    return %arg1, %arg0 : i32, i32
  }
}

</mosaic_0001>

<llo_original>
// kernel: tpu_custom_call.1
$region0: #{tpu_custom_call.1}
  #allocation0 [shape = 'u32[]', space=smem, size = 0x4, offset = 0x4, fixed_abs, tag = 'smem constant byte address 0x4 - core index']
  #allocation1 [shape = 'u32[144,128]{1,0:T(1,128)}', space=vmem, size = 0x12000, scoped, tag = 'internal scratch']
  %s0 = inlined_call_operand.hbm [shape: f32[24,32], index: 0, kind: input, shape index: {}]
  %s1 = inlined_call_operand.hbm [shape: f32[32,128], index: 1, kind: input, shape index: {}]
  %s2 = inlined_call_operand.vmem [shape: f32[1,128], index: 2, kind: input, shape index: {}]
  %s3 = inlined_call_operand.hbm [shape: f32[24,128], index: 3, kind: output, shape index: {}]
  %s4 = sld [smem:[#allocation0]]
  $region30: #{tpu_custom_call.1} parent=0
    _
  %s6 = ssub.s32 1, %s4
  %s7 = scalar_select 0, %s6, %s4
  $region1: #{tpu_custom_call.1} parent=0
    #allocation2 [shape = 'u8[12288]{0}', space=vmem, size = 0x3000, scoped, tag = 'input window, operand 0, single buffered']
    #allocation3 [shape = 's32[1]{0}', space=sflag, size = 0x4, scoped, tag = 'scoped memory for tpu_custom_call.1']
    #allocation4 [shape = 's32[1]{0}', space=sflag, size = 0x4, scoped, tag = 'scoped memory for tpu_custom_call.1']
    #allocation5 [shape = 'u8[16384]{0}', space=vmem, size = 0x4000, scoped, tag = 'input window, operand 1, single buffered']
    #allocation6 [shape = 's32[1]{0}', space=sflag, size = 0x4, scoped, tag = 'scoped memory for tpu_custom_call.1']
    #allocation7 [shape = 'u8[12288]{0}', space=vmem, size = 0x3000, scoped, tag = 'output window, operand 0, single buffered']
    %8 = vsyncpa [#allocation3], 0
    %9 = vsyncpa [#allocation6], 0
    %10 = vsyncpa [#allocation4], 0
    // Predicated region
    $region2: #{tpu_custom_call.1} parent=1 // pred_check
      _
    $region3: #{tpu_custom_call.1} parent=1 // pred_check_branch
      %12 = sbr.rel (0) target = $region5
    $region4: #{tpu_custom_call.1} parent=1 // pred_region
      %s14 = ssub.s32 384, 384
      %15 = vsyncadd [#allocation3], %s14
      %s16 = sshll.u32 [#allocation2], 4
      %s17 = int_to_ptr.vmem [resolvable:$true] %s16
      %22 = dma.hbm_to_vmem [thread:$0]  %s0, 384, %s17, [#allocation3], 128, 128, 8
    $region5: #{tpu_custom_call.1} parent=1 // pred_fallthru
      _
    // Predicated region
    $region6: #{tpu_custom_call.1} parent=1 // pred_check
      _
    $region7: #{tpu_custom_call.1} parent=1 // pred_check_branch
      %24 = sbr.rel (0) target = $region9
    $region8: #{tpu_custom_call.1} parent=1 // pred_region
      %s26 = ssub.s32 512, 512
      %27 = vsyncadd [#allocation6], %s26
      %s28 = sshll.u32 [#allocation5], 4
      %s29 = int_to_ptr.vmem [resolvable:$true] %s28
      %34 = dma.hbm_to_vmem [thread:$0]  %s1, 512, %s29, [#allocation6], 128, 128, 8
    $region9: #{tpu_custom_call.1} parent=1 // pred_fallthru
      _
    // Predicated region
    $region10: #{tpu_custom_call.1} parent=1 // pred_check
      _
    $region11: #{tpu_custom_call.1} parent=1 // pred_check_branch
      %36 = sbr.rel (0) target = $region13
    $region12: #{tpu_custom_call.1} parent=1 // pred_region
      _
    $region13: #{tpu_custom_call.1} parent=1 // pred_fallthru
      _
    // Predicated region
    $region14: #{tpu_custom_call.1} parent=1 // pred_check
      _
    $region15: #{tpu_custom_call.1} parent=1 // pred_check_branch
      %38 = sbr.rel (0) target = $region17
    $region16: #{tpu_custom_call.1} parent=1 // pred_region
      %39 = dma.done [#allocation3], 384
    $region17: #{tpu_custom_call.1} parent=1 // pred_fallthru
      _
    // Predicated region
    $region18: #{tpu_custom_call.1} parent=1 // pred_check
      _
    $region19: #{tpu_custom_call.1} parent=1 // pred_check_branch
      %41 = sbr.rel (0) target = $region21
    $region20: #{tpu_custom_call.1} parent=1 // pred_region
      %42 = dma.done [#allocation6], 512
    $region21: #{tpu_custom_call.1} parent=1 // pred_fallthru
      _
    %v43 = vld [vmem:[#allocation2] sm:$0xff]
    %v44 = vld [vmem:[#allocation2 + $0x8] sm:$0xff]
    %v45 = vld [vmem:[#allocation2 + $0x10] sm:$0xff]
    %v46 = vld [vmem:[#allocation5] sm:$0xff]
    %v47 = vld [vmem:[#allocation5 + $0x8] sm:$0xff]
    %v48 = vld [vmem:[#allocation5 + $0x10] sm:$0xff]
    %v49 = vld [vmem:[#allocation5 + $0x18] sm:$0xff]
    %v50 = vld [vmem:[%s2] sm:$0x1]
    %v52 = vlaneseq
    %v53 = vshrl.u32 %v52, 7
    %v54 = vsub.s32 0, %v53
    %v55 = vrot.slane %v50, %v54
    %vm57 = vcmask 261120
    %v59 = vsel %vm57, %v43, 0
    %v62 = vsel %vm57, %v44, 0
    %v65 = vsel %vm57, %v45, 0
    %67 = vmatprep.subr.mxu0 0.0
    %68 = vmatpush1.msra.mxu0 0.0
    %69 = vmatprep.subr.mxu0 0.0
    %70 = vmatpush1.msra.mxu0 0.0
    %71 = vmatprep.subr.mxu0 0.0
    %72 = vmatpush1.msra.mxu0 0.0
    %73 = vmatprep.subr.mxu0 0.0
    %74 = vmatpush1.msra.mxu0 0.0
    %75 = vmatprep.subr.mxu0 0.0
    %76 = vmatpush1.msra.mxu0 0.0
    %77 = vmatprep.subr.mxu0 0.0
    %78 = vmatpush1.msra.mxu0 0.0
    %79 = vmatprep.subr.mxu0 0.0
    %80 = vmatpush1.msra.mxu0 0.0
    %81 = vmatprep.subr.mxu0 0.0
    %82 = vmatpush1.msra.mxu0 0.0
    %83 = vmatprep.subr.mxu0 0.0
    %84 = vmatpush1.msra.mxu0 0.0
    %85 = vmatprep.subr.mxu0 0.0
    %86 = vmatpush1.msra.mxu0 0.0
    %87 = vmatprep.subr.mxu0 0.0
    %88 = vmatpush1.msra.mxu0 0.0
    %89 = vmatprep.subr.mxu0 0.0
    %90 = vmatpush1.msra.mxu0 0.0
    %91 = vmatprep.subr.mxu0 0.0
    %92 = vmatpush1.msra.mxu0 %v49
    %93 = vmatprep.subr.mxu0 0.0
    %94 = vmatpush1.msra.mxu0 %v48
    %95 = vmatprep.subr.mxu0 0.0
    %96 = vmatpush1.msra.mxu0 %v47
    %97 = vmatprep.subr.mxu0 0.0
    %98 = vmatpush1.msra.mxu0 %v46
    %99 = vmatprep.subr.mxu0 0.0
    %100 = vmatpush2.msra.mxu0 0.0
    %101 = vmatprep.subr.mxu0 0.0
    %102 = vmatpush2.msra.mxu0 0.0
    %103 = vmatprep.subr.mxu0 0.0
    %104 = vmatpush2.msra.mxu0 0.0
    %105 = vmatprep.subr.mxu0 0.0
    %106 = vmatpush2.msra.mxu0 0.0
    %107 = vmatprep.subr.mxu0 0.0
    %108 = vmatpush2.msra.mxu0 0.0
    %109 = vmatprep.subr.mxu0 0.0
    %110 = vmatpush2.msra.mxu0 0.0
    %111 = vmatprep.subr.mxu0 0.0
    %112 = vmatpush2.msra.mxu0 0.0
    %113 = vmatprep.subr.mxu0 0.0
    %114 = vmatpush2.msra.mxu0 0.0
    %115 = vmatprep.subr.mxu0 0.0
    %116 = vmatpush2.msra.mxu0 0.0
    %117 = vmatprep.subr.mxu0 0.0
    %118 = vmatpush2.msra.mxu0 0.0
    %119 = vmatprep.subr.mxu0 0.0
    %120 = vmatpush2.msra.mxu0 0.0
    %121 = vmatprep.subr.mxu0 0.0
    %122 = vmatpush2.msra.mxu0 0.0
    %123 = vmatprep.subr.mxu0 0.0
    %124 = vmatpush2.msra.mxu0 0.0
    %125 = vmatprep.subr.mxu0 0.0
    %126 = vmatpush2.msra.mxu0 0.0
    %127 = vmatprep.subr.mxu0 0.0
    %128 = vmatpush2.msra.mxu0 0.0
    %129 = vmatprep.subr.mxu0 0.0
    %130 = vmatpush2.msra.mxu0 0.0
    %131 = vmatprep.mubr.f32.mxu0 0.0
    %132 = vmatmul.mubr.f32.gmra.mxu0 %v59
    %v133 = vpop.f32.mrf.mxu0
    %v134 = vadd.f32 %v55, %v133
    %v135 = vpop.f32.mrf.mxu0
    %136 = vmatprep.mubr.f32.mxu0 0.0
    %137 = vmatmul.mubr.f32.gmra.mxu0 %v62
    %v138 = vpop.f32.mrf.mxu0
    %v139 = vadd.f32 %v55, %v138
    %v140 = vpop.f32.mrf.mxu0
    %141 = vmatprep.mubr.f32.mxu0 0.0
    %142 = vmatmul.mubr.f32.gmra.mxu0 %v65
    %v143 = vpop.f32.mrf.mxu0
    %v144 = vadd.f32 %v55, %v143
    %v145 = vpop.f32.mrf.mxu0
    %146 = vdwg.mxu0
    %147 = vst [vmem:[#allocation7] sm:$0xff] %v134
    %148 = vst [vmem:[#allocation7 + $0x8] sm:$0xff] %v139
    %149 = vst [vmem:[#allocation7 + $0x10] sm:$0xff] %v144
    // Predicated region
    $region22: #{tpu_custom_call.1} parent=1 // pred_check
      _
    $region23: #{tpu_custom_call.1} parent=1 // pred_check_branch
      %151 = sbr.rel (0) target = $region25
    $region24: #{tpu_custom_call.1} parent=1 // pred_region
      %s153 = ssub.s32 384, 384
      %154 = vsyncadd [#allocation4], %s153
      %s155 = sshll.u32 [#allocation7], 4
      %s156 = int_to_ptr.vmem [resolvable:$true] %s155
      %161 = dma.vmem_to_hbm [thread:$0]  %s156, 384, %s3, [#allocation4], 128, 128, 8
    $region25: #{tpu_custom_call.1} parent=1 // pred_fallthru
      _
    // Predicated region
    $region26: #{tpu_custom_call.1} parent=1 // pred_check
      _
    $region27: #{tpu_custom_call.1} parent=1 // pred_check_branch
      %163 = sbr.rel (0) target = $region29
    $region28: #{tpu_custom_call.1} parent=1 // pred_region
      %164 = dma.done [#allocation4], 384
    $region29: #{tpu_custom_call.1} parent=1 // pred_fallthru
      _
    %165 = vsyncpa [#allocation3], 1
    %166 = vsyncpa [#allocation6], 1
    %167 = vsyncpa [#allocation4], 1

</llo_original>
